<compile_context>
chip_gen: v6e
topology: v6e:2x2x1
jax: 0.10.0
libtpu: 0.0.40
codegen_flags: <defaults>
</compile_context>

<pallas_src>
import numpy as np
import jax
import jax.numpy as jnp
from jax.experimental import pallas as pl
from jax.experimental.pallas import tpu as pltpu

_TWO_PI = np.float32(2.0 * np.pi)


def _round_up(v, m):
    return ((v + m - 1) // m) * m


def _make_gfp_kernel(h_pad, out_dtype):
    """sin/cos share one half-width argument; two lane-aligned unmasked stores."""

    def kernel(x_ref, w_ref, out_ref):
        # x_ref: (tb, 1) f32, w_ref: (1, h_pad) f32 (= 2*pi*W, lane-padded),
        # out_ref: (tb, 2*h_pad) out_dtype.
        arg = x_ref[...] * w_ref[...]                     # (tb, h_pad) VPU bcast mul
        # TODO(synk): a hand-rolled shared-range-reduction sincos would cut the
        # remaining VALU work ~30% on v6e/v7x; jnp.sin/jnp.cos each redo it.
        out_ref[:, :h_pad] = jnp.sin(arg).astype(out_dtype)
        out_ref[:, h_pad:] = jnp.cos(arg).astype(out_dtype)

    return kernel


def make_gaussian_fourier_projection(W, *, out_dtype=jnp.float32,
                                     target_block_bytes=2 << 20):
    """Returns a jitted callable x:(B,) -> (B, 2*len(W)).

    W is the module's non-trainable random projection (embed_dim // 2,).
    All constant preprocessing (fold 2*pi, lane padding) happens once here.
    """
    half = int(W.shape[0])
    embed_dim = 2 * half
    h_pad = max(128, _round_up(half, 128))          # lane-aligned half width
    d_pad = 2 * h_pad
    itemsize = jnp.dtype(out_dtype).itemsize

    # Hoisted per-module constant: 2*pi folded into W once, padded to h_pad.
    w2d = jnp.pad(W.astype(jnp.float32) * _TWO_PI,
                  (0, h_pad - half)).reshape(1, h_pad)

    kernel = _make_gfp_kernel(h_pad, out_dtype)

    def forward(x):
        B = x.shape[0]
        b8 = max(8, _round_up(B, 8))

        # Byte-targeted batch tile (multiple of 8): ~target_block_bytes per
        # output block -> ~2x that double-buffered, comfortable on every
        # generation (incl. v7x's 32 MiB scoped-VMEM default).
        tb = max(8, (target_block_bytes // (d_pad * itemsize)) // 8 * 8)
        # Guarantee >=2 grid steps so both v7x TensorCores get work
        # (harmless on the single-TC v5e/v6e).
        if b8 >= 16:
            tb = min(tb, _round_up((b8 + 1) // 2, 8))
        tb = min(tb, b8)
        b_pad = _round_up(B, tb)

        x2d = x.astype(jnp.float32).reshape(B, 1)
        if b_pad != B:                               # pad only when needed
            x2d = jnp.pad(x2d, ((0, b_pad - B), (0, 0)))

        out = pl.pallas_call(
            kernel,
            out_shape=jax.ShapeDtypeStruct((b_pad, d_pad), out_dtype),
            grid=(b_pad // tb,),
            in_specs=[
                pl.BlockSpec((tb, 1), lambda i: (i, 0)),     # time steps, tiled
                pl.BlockSpec((1, h_pad), lambda i: (0, 0)),  # 2*pi*W, resident
            ],
            out_specs=pl.BlockSpec((tb, d_pad), lambda i: (i, 0)),
            compiler_params=pltpu.CompilerParams(
                dimension_semantics=("parallel",)),
        )(x2d, w2d)

        # Slice / re-pack only when shapes are misaligned; aligned shapes get
        # the kernel output back directly (avoids a full-output HBM copy).
        if half == h_pad:
            return out if b_pad == B else out[:B]
        return jnp.concatenate(
            [out[:B, :half], out[:B, h_pad:h_pad + half]], axis=-1)

    return jax.jit(forward)


if __name__ == "__main__":
    # Small shapes consistent with the module's forward.
    embed_dim = 32
    scale = 30.0
    batch = 8

    key = jax.random.PRNGKey(0)
    k_w, k_x = jax.random.split(key)

    # Non-trainable random projection: W = randn(embed_dim // 2) * scale.
    W = jax.random.normal(k_w, (embed_dim // 2,), dtype=jnp.float32) * scale
    # Scalar time steps x: shape (batch,), uniform in [0, 1).
    x = jax.random.uniform(k_x, (batch,), dtype=jnp.float32)

    gfp = make_gaussian_fourier_projection(W)
    out = jax.block_until_ready(gfp(x))

    # Pure-JAX reference (same math / op order as the PyTorch forward).
    x_proj = x[:, None] * W[None, :] * 2.0 * np.pi
    ref = jnp.concatenate([jnp.sin(x_proj), jnp.cos(x_proj)], axis=-1)

    assert out.shape == (batch, embed_dim)
    # Small atol: pre-folding 2*pi into W reorders f32 argument rounding for
    # large |arg| (~|arg|*eps); otherwise identical math (direct cos, no phase
    # trick).
    assert jnp.allclose(out, ref, atol=5e-4, rtol=1e-5), float(
        jnp.max(jnp.abs(out - ref)))

    print("KERNEL_OK")
</pallas_src>

<mosaic_0001>
module attributes {stable_mosaic.version = 11 : i64} {
  func.func @kernel(%arg0: i32, %arg1: memref<8x1xf32, #tpu.memory_space<vmem>>, %arg2: memref<1x128xf32, #tpu.memory_space<vmem>>, %arg3: memref<8x256xf32, #tpu.memory_space<vmem>>) attributes {dimension_semantics = [#tpu.dimension_semantics<parallel>], iteration_bounds = array<i64: 1>, scalar_prefetch = 0 : i64, scratch_operands = 0 : i64, tpu.core_type = #tpu.core_type<tc>, window_params = [{transform_indices = @transform_0, window_bounds = array<i64: 8, 1>}, {pipeline_mode = #tpu.pipeline_mode<synchronous>, transform_indices = @transform_1, window_bounds = array<i64: 1, 128>}, {transform_indices = @transform_2, window_bounds = array<i64: 8, 256>}]} {
    %c0 = arith.constant 0 : index
    %c0_0 = arith.constant 0 : index
    %0 = vector.load %arg1[%c0, %c0_0] : memref<8x1xf32, #tpu.memory_space<vmem>>, vector<8x1xf32>
    %c0_1 = arith.constant 0 : index
    %c0_2 = arith.constant 0 : index
    %1 = vector.load %arg2[%c0_1, %c0_2] : memref<1x128xf32, #tpu.memory_space<vmem>>, vector<1x128xf32>
    %2 = vector.broadcast %0 : vector<8x1xf32> to vector<8x128xf32>
    %3 = vector.broadcast %1 : vector<1x128xf32> to vector<8x128xf32>
    %4 = arith.mulf %2, %3 : vector<8x128xf32>
    %5 = math.sin %4 : vector<8x128xf32>
    %c0_3 = arith.constant 0 : index
    %c0_4 = arith.constant 0 : index
    %6 = vector.load %arg3[%c0_3, %c0_4] : memref<8x256xf32, #tpu.memory_space<vmem>>, vector<8x128xf32>
    tpu.vector_store %arg3[%c0_3, %c0_4], %5 {strides = array<i32>} : memref<8x256xf32, #tpu.memory_space<vmem>>, vector<8x128xf32>,
    %7 = math.cos %4 : vector<8x128xf32>
    %c0_5 = arith.constant 0 : index
    %c128 = arith.constant 128 : index
    %8 = vector.load %arg3[%c0_5, %c128] : memref<8x256xf32, #tpu.memory_space<vmem>>, vector<8x128xf32>
    tpu.vector_store %arg3[%c0_5, %c128], %7 {strides = array<i32>} : memref<8x256xf32, #tpu.memory_space<vmem>>, vector<8x128xf32>,
    return
  }
  func.func @transform_0(%arg0: i32) -> (i32, i32) {
    %c0_i32 = arith.constant 0 : i32
    %c0_i32_0 = arith.constant 0 : i32
    return %arg0, %c0_i32 : i32, i32
  }
  func.func @transform_1(%arg0: i32) -> (i32, i32) {
    %c0_i32 = arith.constant 0 : i32
    %c0_i32_0 = arith.constant 0 : i32
    %c0_i32_1 = arith.constant 0 : i32
    return %c0_i32, %c0_i32_0 : i32, i32
  }
  func.func @transform_2(%arg0: i32) -> (i32, i32) {
    %c0_i32 = arith.constant 0 : i32
    %c0_i32_0 = arith.constant 0 : i32
    return %arg0, %c0_i32 : i32, i32
  }
}

</mosaic_0001>

<llo_original>
// kernel: forward.1
$region0: #{forward.1}
  #allocation0 [shape = 'u32[]', space=smem, size = 0x4, offset = 0x4, fixed_abs, tag = 'smem constant byte address 0x4 - core index']
  #allocation1 [shape = 'u32[144,128]{1,0:T(1,128)}', space=vmem, size = 0x12000, scoped, tag = 'internal scratch']
  %s0 = inlined_call_operand.vmem [shape: f32[8,1], index: 0, kind: input, shape index: {}]
  %s1 = inlined_call_operand.vmem [shape: f32[1,128], index: 1, kind: input, shape index: {}]
  %s2 = inlined_call_operand.vmem [shape: f32[8,256], index: 2, kind: output, shape index: {}]
  %s3 = sld [smem:[#allocation0]]
  $region18: #{forward.1} parent=0
    _
  %s5 = ssub.s32 1, %s3
  %s6 = scalar_select 0, %s5, %s3
  // Predicated region
  $region2: #{forward.1} parent=0 // pred_check
    _
  $region3: #{forward.1} parent=0 // pred_check_branch
    %8 = sbr.rel (0) target = $region5
  $region4: #{forward.1} parent=0 // pred_region
    _
  $region5: #{forward.1} parent=0 // pred_fallthru
    _
  // Predicated region
  $region6: #{forward.1} parent=0 // pred_check
    _
  $region7: #{forward.1} parent=0 // pred_check_branch
    %10 = sbr.rel (0) target = $region9
  $region8: #{forward.1} parent=0 // pred_region
    _
  $region9: #{forward.1} parent=0 // pred_fallthru
    _
  %v11 = vld [vmem:[%s0] sm:$0xff]
  %v12 = vld [vmem:[%s1] sm:$0x1]
  %14 = vset.pattern.permute.xlu0 0
  %15 = vperm.xlu0 %14, %v11
  %v16 = vpop.permute.xlu0 %15
  %v19 = vlaneseq
  %v20 = vshrl.u32 %v19, 7
  %v21 = vsub.s32 0, %v20
  %v22 = vrot.slane %v12, %v21
  %v24 = vmul.f32 %v16, %v22
  %v25 = vand.u32 2147483647, %v24
  %vm26 = vcmp.le.f32.partialorder %v25, 0.7853982
  %vm27 = vcmp.lt.s32.totalorder %v24, 0
  %v28 = vand.u32 %v24, 2139095040
  %v29 = vshrl.u32 %v28, 23
  %v30 = vsub.s32 %v29, 127
  %v31 = vand.u32 2147483647, %v24
  %v32 = vand.u32 %v31, 8388607
  %v33 = vor.u32 %v32, 8388608
  %v34 = vsub.s32 0, %v33
  %v35 = vadd.s32 %v30, 1
  %vm36 = vcmp.gt.s32.totalorder %v35, 0
  %v37 = vsel %vm36, %v35, 0
  %v38 = vshrl.u32 %v37, 5
  %v39 = vand.u32 %v37, 31
  %v40 = vsub.s32 32, %v39
  %v41 = vshrl.u32 683565275, %v40
  %v42 = vshll.u32 683565275, %v39
  %v43 = vshrl.u32 2475754826, %v40
  %v44 = vor.u32 %v42, %v43
  %v45 = vshll.u32 2475754826, %v39
  %v46 = vshrl.u32 2131351028, %v40
  %v47 = vor.u32 %v45, %v46
  %v48 = vshll.u32 2131351028, %v39
  %v49 = vshrl.u32 2102212464, %v40
  %v50 = vor.u32 %v48, %v49
  %v51 = vshll.u32 2102212464, %v39
  %v52 = vshrl.u32 920167782, %v40
  %v53 = vor.u32 %v51, %v52
  %v54 = vshll.u32 920167782, %v39
  %v55 = vshrl.u32 1326507024, %v40
  %v56 = vor.u32 %v54, %v55
  %vm57 = vcmp.lt.s32.totalorder %v38, 1
  %vm58 = vcmp.lt.s32.totalorder %v38, 2
  %vm59 = vcmp.lt.s32.totalorder %v38, 3
  %vm60 = vcmp.lt.s32.totalorder %v38, 4
  %v61 = vsel %vm57, %v41, %v44
  %v62 = vsel %vm60, %v50, 2102212464
  %v63 = vsel %vm59, %v47, %v62
  %v64 = vsel %vm58, %v61, %v63
  %v65 = vsel %vm57, %v44, %v47
  %v66 = vsel %vm60, %v53, 920167782
  %v67 = vsel %vm59, %v50, %v66
  %v68 = vsel %vm58, %v65, %v67
  %v69 = vsel %vm57, %v47, %v50
  %v70 = vsel %vm60, %v56, 1326507024
  %v71 = vsel %vm59, %v53, %v70
  %v72 = vsel %vm58, %v69, %v71
  %v73 = vshll.u32 %v33, 8
  %v74 = vmul.u32.u64.compose %v73, %v72
  %v75 = vextract.low.u32 %v74
  %v76 = vextract.high.u32 %v74
  %v77 = vmul.u32.u64.compose %v73, %v68
  %v78 = vextract.low.u32 %v77
  %v79 = vextract.high.u32 %v77
  %v80 = vmul.u32 %v73, %v64
  %v81 = vadd.s32 %v76, %v78
  %vm82 = vc.u32 %v76, %v78
  %v83 = vadd.s32 %v79, 1
  %v84 = vsel %vm82, %v83, %v79
  %v85 = vadd.s32 %v80, %v84
  %v86 = vadd.s32 %v85, 536870912
  %v87 = vshrl.u32 %v86, 30
  %v88 = vshll.u32 %v87, 30
  %v89 = vsub.s32 %v85, %v88
  %vm90 = vcmp.lt.s32.totalorder %v89, 0
  %v91 = vsub.s32 0, %v89
  %v92 = vsel %vm90, %v91, %v89
  %v93 = vclz %v92
  %v94 = vsub.s32 %v93, 2
  %vm95 = vcmp.gt.s32.totalorder 0, %v94
  %v96 = vsel %vm95, 0, %v94
  %v97 = vsub.s32 32, %v96
  %v98 = vshll.u32 %v89, %v96
  %v99 = vshrl.u32 %v81, %v97
  %v100 = vor.u32 %v98, %v99
  %v101 = vsub.s32 4294967266, %v96
  %v102 = vadd.s32 %v101, 127
  %v103 = vshll.u32 %v102, 23
  %v104 = vor.u32 4788187, %v103
  %v105 = vand.u32 2147483647, %v104
  %v107 = vcvt.s32.f32 %v100
  %v108 = vmul.f32 %v107, %v105
  %v109 = vxor.u32 %v108, 2147483648
  %v110 = vsel %vm27, %v109, %v108
  %v111 = vsub.s32 4, %v87
  %v112 = vsel %vm27, %v111, %v87
  %v113 = vsel %vm26, %v24, %v110
  %v114 = vsel %vm26, 0, %v112
  %v115 = vcosq.f32.pop %v113
  %v116 = vsinq.f32.pop %v113
  %vm117 = vweird.f32 %v24
  %v118 = vadd.s32 %v114, 3
  %v119 = vand.u32 %v118, 3
  %vm120 = vcmp.lt.s32.totalorder %v119, 2
  %vm121 = vcmp.eq.s32.totalorder %v119, 0
  %v122 = vxor.u32 %v116, 2147483648
  %v123 = vsel %vm121, %v115, %v122
  %vm124 = vcmp.eq.s32.totalorder %v119, 2
  %v125 = vxor.u32 %v115, 2147483648
  %v126 = vsel %vm124, %v125, %v116
  %v127 = vsel %vm120, %v123, %v126
  %v128 = vsel %vm117, nan, %v127
  %129 = vst [vmem:[%s2] sm:$0xff] %v128
  %v130 = vand.u32 2147483647, %v24
  %vm131 = vcmp.le.f32.partialorder %v130, 0.7853982
  %vm132 = vcmp.lt.s32.totalorder %v24, 0
  %v133 = vand.u32 %v24, 2139095040
  %v134 = vshrl.u32 %v133, 23
  %v135 = vsub.s32 %v134, 127
  %v136 = vand.u32 2147483647, %v24
  %v137 = vand.u32 %v136, 8388607
  %v138 = vor.u32 %v137, 8388608
  %v139 = vsub.s32 0, %v138
  %v140 = vadd.s32 %v135, 1
  %vm141 = vcmp.gt.s32.totalorder %v140, 0
  %v142 = vsel %vm141, %v140, 0
  %v143 = vshrl.u32 %v142, 5
  %v144 = vand.u32 %v142, 31
  %v145 = vsub.s32 32, %v144
  %v146 = vshrl.u32 683565275, %v145
  %v147 = vshll.u32 683565275, %v144
  %v148 = vshrl.u32 2475754826, %v145
  %v149 = vor.u32 %v147, %v148
  %v150 = vshll.u32 2475754826, %v144
  %v151 = vshrl.u32 2131351028, %v145
  %v152 = vor.u32 %v150, %v151
  %v153 = vshll.u32 2131351028, %v144
  %v154 = vshrl.u32 2102212464, %v145
  %v155 = vor.u32 %v153, %v154
  %v156 = vshll.u32 2102212464, %v144
  %v157 = vshrl.u32 920167782, %v145
  %v158 = vor.u32 %v156, %v157
  %v159 = vshll.u32 920167782, %v144
  %v160 = vshrl.u32 1326507024, %v145
  %v161 = vor.u32 %v159, %v160
  %vm162 = vcmp.lt.s32.totalorder %v143, 1
  %vm163 = vcmp.lt.s32.totalorder %v143, 2
  %vm164 = vcmp.lt.s32.totalorder %v143, 3
  %vm165 = vcmp.lt.s32.totalorder %v143, 4
  %v166 = vsel %vm162, %v146, %v149
  %v167 = vsel %vm165, %v155, 2102212464
  %v168 = vsel %vm164, %v152, %v167
  %v169 = vsel %vm163, %v166, %v168
  %v170 = vsel %vm162, %v149, %v152
  %v171 = vsel %vm165, %v158, 920167782
  %v172 = vsel %vm164, %v155, %v171
  %v173 = vsel %vm163, %v170, %v172
  %v174 = vsel %vm162, %v152, %v155
  %v175 = vsel %vm165, %v161, 1326507024
  %v176 = vsel %vm164, %v158, %v175
  %v177 = vsel %vm163, %v174, %v176
  %v178 = vshll.u32 %v138, 8
  %v179 = vmul.u32.u64.compose %v178, %v177
  %v180 = vextract.low.u32 %v179
  %v181 = vextract.high.u32 %v179
  %v182 = vmul.u32.u64.compose %v178, %v173
  %v183 = vextract.low.u32 %v182
  %v184 = vextract.high.u32 %v182
  %v185 = vmul.u32 %v178, %v169
  %v186 = vadd.s32 %v181, %v183
  %vm187 = vc.u32 %v181, %v183
  %v188 = vadd.s32 %v184, 1
  %v189 = vsel %vm187, %v188, %v184
  %v190 = vadd.s32 %v185, %v189
  %v191 = vadd.s32 %v190, 536870912
  %v192 = vshrl.u32 %v191, 30
  %v193 = vshll.u32 %v192, 30
  %v194 = vsub.s32 %v190, %v193
  %vm195 = vcmp.lt.s32.totalorder %v194, 0
  %v196 = vsub.s32 0, %v194
  %v197 = vsel %vm195, %v196, %v194
  %v198 = vclz %v197
  %v199 = vsub.s32 %v198, 2
  %vm200 = vcmp.gt.s32.totalorder 0, %v199
  %v201 = vsel %vm200, 0, %v199
  %v202 = vsub.s32 32, %v201
  %v203 = vshll.u32 %v194, %v201
  %v204 = vshrl.u32 %v186, %v202
  %v205 = vor.u32 %v203, %v204
  %v206 = vsub.s32 4294967266, %v201
  %v207 = vadd.s32 %v206, 127
  %v208 = vshll.u32 %v207, 23
  %v209 = vor.u32 4788187, %v208
  %v210 = vand.u32 2147483647, %v209
  %v212 = vcvt.s32.f32 %v205
  %v213 = vmul.f32 %v212, %v210
  %v214 = vxor.u32 %v213, 2147483648
  %v215 = vsel %vm132, %v214, %v213
  %v216 = vsub.s32 4, %v192
  %v217 = vsel %vm132, %v216, %v192
  %v218 = vsel %vm131, %v24, %v215
  %v219 = vsel %vm131, 0, %v217
  %v220 = vcosq.f32.pop %v218
  %v221 = vsinq.f32.pop %v218
  %vm222 = vweird.f32 %v24
  %v223 = vand.u32 %v219, 3
  %vm224 = vcmp.lt.s32.totalorder %v223, 2
  %vm225 = vcmp.eq.s32.totalorder %v223, 0
  %v226 = vxor.u32 %v221, 2147483648
  %v227 = vsel %vm225, %v220, %v226
  %vm228 = vcmp.eq.s32.totalorder %v223, 2
  %v229 = vxor.u32 %v220, 2147483648
  %v230 = vsel %vm228, %v229, %v221
  %v231 = vsel %vm224, %v227, %v230
  %v232 = vsel %vm222, nan, %v231
  %233 = vst [vmem:[%s2 + $0x8] sm:$0xff] %v232
  // Predicated region
  $region10: #{forward.1} parent=0 // pred_check
    _
  $region11: #{forward.1} parent=0 // pred_check_branch
    %235 = sbr.rel (0) target = $region13
  $region12: #{forward.1} parent=0 // pred_region
    _
  $region13: #{forward.1} parent=0 // pred_fallthru
    _
  // Predicated region
  $region14: #{forward.1} parent=0 // pred_check
    _
  $region15: #{forward.1} parent=0 // pred_check_branch
    %237 = sbr.rel (0) target = $region17
  $region16: #{forward.1} parent=0 // pred_region
    _
  $region17: #{forward.1} parent=0 // pred_fallthru
    _

</llo_original>
